<compile_context>
chip_gen: v7x
topology: tpu7x:2x2x1
jax: 0.10.0
libtpu: 0.0.40
codegen_flags: <defaults>
</compile_context>

<pallas_src>
import jax
import jax.numpy as jnp
from jax.experimental import pallas as pl
from jax.experimental.pallas import tpu as pltpu


def _round_up(x, m):
    return ((x + m - 1) // m) * m


def mlp_kernel(x_ref, w1_ref, b1_ref, w2_ref, b2_ref, w3_ref, b3_ref, o_ref):
    # Biases loaded once per tile (f32).
    b1 = b1_ref[...]
    b2 = b2_ref[...]
    b3 = b3_ref[...]

    # Layer 1: bf16 MXU matmul, f32 accumulation; bias-add + ReLU on the VPU in f32.
    h1 = jnp.dot(x_ref[...], w1_ref[...], preferred_element_type=jnp.float32)
    h1 = jnp.maximum(h1 + b1, 0.0)
    # Dropout(0.2): identity at inference.

    # Layer 2
    h2 = jnp.dot(h1.astype(jnp.bfloat16), w2_ref[...],
                 preferred_element_type=jnp.float32)
    h2 = jnp.maximum(h2 + b2, 0.0)
    # Dropout(0.2): identity at inference.

    # Layer 3: lane-dense (padded) logits slab; padded columns stay exactly zero.
    out = jnp.dot(h2.astype(jnp.bfloat16), w3_ref[...],
                  preferred_element_type=jnp.float32)
    o_ref[...] = out + b3


def prepare_params(params):
    """One-time padding + bf16 cast of the constant weights (hoisted out of forward).

    params: (w1, b1, w2, b2, w3, b3) with weights stored (in, out), biases (1, out).
    """
    w1, b1, w2, b2, w3, b3 = params
    f, hidden = w1.shape
    num_classes = w3.shape[1]
    f_pad = _round_up(f, 128)
    h_pad = _round_up(hidden, 128)
    c_pad = _round_up(num_classes, 128)

    def pad2(a, shape, dtype):
        return jnp.zeros(shape, dtype).at[:a.shape[0], :a.shape[1]].set(a.astype(dtype))

    return {
        "w1": pad2(w1, (f_pad, h_pad), jnp.bfloat16),
        "b1": pad2(b1, (1, h_pad), jnp.float32),
        "w2": pad2(w2, (h_pad, h_pad), jnp.bfloat16),
        "b2": pad2(b2, (1, h_pad), jnp.float32),
        "w3": pad2(w3, (h_pad, c_pad), jnp.bfloat16),
        "b3": pad2(b3, (1, c_pad), jnp.float32),
        "input_size": f,
        "num_classes": num_classes,
    }


def speaker_classifier_forward(x, prepared, *, tile_m=512):
    """x: (B, ...) flattened to (B, input_size). Returns (B, num_classes) f32 logits."""
    b = x.shape[0]
    x2d = x.reshape(b, -1)
    f = x2d.shape[1]
    assert f == prepared["input_size"], "input feature size mismatch"

    w1p, b1p = prepared["w1"], prepared["b1"]
    w2p, b2p = prepared["w2"], prepared["b2"]
    w3p, b3p = prepared["w3"], prepared["b3"]
    num_classes = prepared["num_classes"]
    f_pad = w1p.shape[0]
    h_pad = w2p.shape[0]
    c_pad = w3p.shape[1]

    # Single cast pass to bf16 for the MXU; no zero-padded HBM copy of x.
    xk = x2d.astype(jnp.bfloat16)
    if f != f_pad:
        # Only needed when the feature dim is not already 128-lane aligned.
        xk = jnp.pad(xk, ((0, 0), (0, f_pad - f)))

    # Batch tile: >=16 rows (bf16 sublane packing), multiple of 16, capped so the grid
    # has >=2 steps when possible (v7x megacore). Tiny batches use one full-extent block.
    tile_m = max(16, _round_up(tile_m, 16))
    tm = min(tile_m, _round_up(pl.cdiv(b, 2), 16))
    if tm >= b:
        tm = b          # single block equal to the full batch dim (always legal)
        grid_m = 1
    else:
        grid_m = pl.cdiv(b, tm)
        # Partial last block: out-of-bounds input rows are unspecified, but each output
        # row depends only on its own input row and OOB output rows are discarded.

    cost = pl.CostEstimate(
        flops=2 * b * (f_pad * h_pad + h_pad * h_pad + h_pad * c_pad),
        transcendentals=0,
        bytes_accessed=(xk.size * 2
                        + (w1p.size + w2p.size + w3p.size) * 2
                        + (b1p.size + b2p.size + b3p.size) * 4
                        + b * c_pad * 4),
    )

    out_padded = pl.pallas_call(
        mlp_kernel,
        out_shape=jax.ShapeDtypeStruct((b, c_pad), jnp.float32),
        grid_spec=pltpu.PrefetchScalarGridSpec(
            num_scalar_prefetch=0,
            grid=(grid_m,),
            in_specs=[
                # x tile streams with the batch grid axis.
                pl.BlockSpec((tm, f_pad), lambda i: (i, 0)),
                # Weights / biases: constant index_map -> fetched once, resident in VMEM.
                pl.BlockSpec((f_pad, h_pad), lambda i: (0, 0)),
                pl.BlockSpec((1, h_pad), lambda i: (0, 0)),
                pl.BlockSpec((h_pad, h_pad), lambda i: (0, 0)),
                pl.BlockSpec((1, h_pad), lambda i: (0, 0)),
                pl.BlockSpec((h_pad, c_pad), lambda i: (0, 0)),
                pl.BlockSpec((1, c_pad), lambda i: (0, 0)),
            ],
            out_specs=pl.BlockSpec((tm, c_pad), lambda i: (i, 0)),
        ),
        compiler_params=pltpu.CompilerParams(
            dimension_semantics=("parallel",),
        ),
        cost_estimate=cost,
    )(xk, w1p, b1p, w2p, b2p, w3p, b3p)

    # Strip logit-column padding (batch rows are exact: out_shape first dim == b).
    return out_padded[:, :num_classes]


def init_params(key, input_size, num_classes, hidden_size=80):
    """Deterministic synthetic init; weights stored (in, out), biases (1, out)."""
    ks = jax.random.split(key, 6)

    def lin(kw, kb, fan_in, fan_out):
        bound = 1.0 / jnp.sqrt(fan_in)
        w = jax.random.uniform(kw, (fan_in, fan_out), jnp.float32, -bound, bound)
        bia = jax.random.uniform(kb, (1, fan_out), jnp.float32, -bound, bound)
        return w, bia

    w1, b1 = lin(ks[0], ks[1], input_size, hidden_size)
    w2, b2 = lin(ks[2], ks[3], hidden_size, hidden_size)
    w3, b3 = lin(ks[4], ks[5], hidden_size, num_classes)
    return (w1, b1, w2, b2, w3, b3)


if __name__ == "__main__":
    key = jax.random.PRNGKey(0)
    kx, kp = jax.random.split(key)

    # Small shapes: batch=2, "feature map" 4x16x16 -> input_size = 1024, 10 classes, hidden=80.
    B, C, H, W = 2, 4, 16, 16
    input_size = C * H * W
    num_classes = 10
    hidden_size = 80

    x = jax.random.normal(kx, (B, C, H, W), jnp.float32)
    params = init_params(kp, input_size, num_classes, hidden_size)

    # One-time weight prep (padding + bf16 cast), hoisted out of the forward path.
    prepared = prepare_params(params)

    out = speaker_classifier_forward(x, prepared)
    out = jax.block_until_ready(out)

    # Pure-JAX reference with the same bf16 MXU-operand rounding, f32 accumulation.
    w1, b1, w2, b2, w3, b3 = params
    bf = lambda a: a.astype(jnp.bfloat16).astype(jnp.float32)
    xf = bf(x.reshape(B, -1))
    h = jnp.maximum(xf @ bf(w1) + b1, 0.0)
    h = jnp.maximum(bf(h) @ bf(w2) + b2, 0.0)
    ref = bf(h) @ bf(w3) + b3

    assert out.shape == (B, num_classes)
    assert jnp.allclose(out, ref, atol=1e-2, rtol=1e-2), "mismatch vs reference"

    print("KERNEL_OK")
</pallas_src>

<mosaic_0001>
module attributes {stable_mosaic.version = 11 : i64} {
  func.func @mlp_kernel(%arg0: i32, %arg1: memref<2x1024xbf16, #tpu.memory_space<vmem>>, %arg2: memref<1024x128xbf16, #tpu.memory_space<vmem>>, %arg3: memref<1x128xf32, #tpu.memory_space<vmem>>, %arg4: memref<128x128xbf16, #tpu.memory_space<vmem>>, %arg5: memref<1x128xf32, #tpu.memory_space<vmem>>, %arg6: memref<128x128xbf16, #tpu.memory_space<vmem>>, %arg7: memref<1x128xf32, #tpu.memory_space<vmem>>, %arg8: memref<2x128xf32, #tpu.memory_space<vmem>>) attributes {dimension_semantics = [#tpu.dimension_semantics<parallel>], iteration_bounds = array<i64: 1>, scalar_prefetch = 0 : i64, scratch_operands = 0 : i64, tpu.core_type = #tpu.core_type<tc>, window_params = [{transform_indices = @transform_0, window_bounds = array<i64: 2, 1024>}, {pipeline_mode = #tpu.pipeline_mode<synchronous>, transform_indices = @transform_1, window_bounds = array<i64: 1024, 128>}, {pipeline_mode = #tpu.pipeline_mode<synchronous>, transform_indices = @transform_2, window_bounds = array<i64: 1, 128>}, {pipeline_mode = #tpu.pipeline_mode<synchronous>, transform_indices = @transform_3, window_bounds = array<i64: 128, 128>}, {pipeline_mode = #tpu.pipeline_mode<synchronous>, transform_indices = @transform_4, window_bounds = array<i64: 1, 128>}, {pipeline_mode = #tpu.pipeline_mode<synchronous>, transform_indices = @transform_5, window_bounds = array<i64: 128, 128>}, {pipeline_mode = #tpu.pipeline_mode<synchronous>, transform_indices = @transform_6, window_bounds = array<i64: 1, 128>}, {transform_indices = @transform_7, window_bounds = array<i64: 2, 128>}]} {
    %c0 = arith.constant 0 : index
    %c0_0 = arith.constant 0 : index
    %0 = vector.load %arg3[%c0, %c0_0] : memref<1x128xf32, #tpu.memory_space<vmem>>, vector<1x128xf32>
    %c0_1 = arith.constant 0 : index
    %c0_2 = arith.constant 0 : index
    %1 = vector.load %arg5[%c0_1, %c0_2] : memref<1x128xf32, #tpu.memory_space<vmem>>, vector<1x128xf32>
    %c0_3 = arith.constant 0 : index
    %c0_4 = arith.constant 0 : index
    %2 = vector.load %arg7[%c0_3, %c0_4] : memref<1x128xf32, #tpu.memory_space<vmem>>, vector<1x128xf32>
    %c0_5 = arith.constant 0 : index
    %c0_6 = arith.constant 0 : index
    %3 = vector.load %arg1[%c0_5, %c0_6] : memref<2x1024xbf16, #tpu.memory_space<vmem>>, vector<2x1024xbf16>
    %c0_7 = arith.constant 0 : index
    %c0_8 = arith.constant 0 : index
    %4 = vector.load %arg2[%c0_7, %c0_8] : memref<1024x128xbf16, #tpu.memory_space<vmem>>, vector<1024x128xbf16>
    %cst = arith.constant dense<0.000000e+00> : vector<2x128xf32>
    %5 = tpu.matmul %3, %4, %cst {dimension_numbers = #tpu.dot_dimension_numbers<[1], [0], [0], [1], [0, 0, 1, 1], [], []>} : vector<2x1024xbf16>, vector<1024x128xbf16>, vector<2x128xf32> -> vector<2x128xf32>
    %6 = vector.broadcast %0 : vector<1x128xf32> to vector<2x128xf32>
    %7 = arith.addf %5, %6 : vector<2x128xf32>
    %cst_9 = arith.constant 0.000000e+00 : f32
    %8 = vector.broadcast %cst_9 : f32 to vector<2x128xf32>
    %9 = arith.maximumf %7, %8 : vector<2x128xf32>
    %10 = arith.truncf %9 : vector<2x128xf32> to vector<2x128xbf16>
    %c0_10 = arith.constant 0 : index
    %c0_11 = arith.constant 0 : index
    %11 = vector.load %arg4[%c0_10, %c0_11] : memref<128x128xbf16, #tpu.memory_space<vmem>>, vector<128x128xbf16>
    %cst_12 = arith.constant dense<0.000000e+00> : vector<2x128xf32>
    %12 = tpu.matmul %10, %11, %cst_12 {dimension_numbers = #tpu.dot_dimension_numbers<[1], [0], [0], [1], [0, 0, 1, 1], [], []>} : vector<2x128xbf16>, vector<128x128xbf16>, vector<2x128xf32> -> vector<2x128xf32>
    %13 = vector.broadcast %1 : vector<1x128xf32> to vector<2x128xf32>
    %14 = arith.addf %12, %13 : vector<2x128xf32>
    %cst_13 = arith.constant 0.000000e+00 : f32
    %15 = vector.broadcast %cst_13 : f32 to vector<2x128xf32>
    %16 = arith.maximumf %14, %15 : vector<2x128xf32>
    %17 = arith.truncf %16 : vector<2x128xf32> to vector<2x128xbf16>
    %c0_14 = arith.constant 0 : index
    %c0_15 = arith.constant 0 : index
    %18 = vector.load %arg6[%c0_14, %c0_15] : memref<128x128xbf16, #tpu.memory_space<vmem>>, vector<128x128xbf16>
    %cst_16 = arith.constant dense<0.000000e+00> : vector<2x128xf32>
    %19 = tpu.matmul %17, %18, %cst_16 {dimension_numbers = #tpu.dot_dimension_numbers<[1], [0], [0], [1], [0, 0, 1, 1], [], []>} : vector<2x128xbf16>, vector<128x128xbf16>, vector<2x128xf32> -> vector<2x128xf32>
    %20 = vector.broadcast %2 : vector<1x128xf32> to vector<2x128xf32>
    %21 = arith.addf %19, %20 : vector<2x128xf32>
    %c0_17 = arith.constant 0 : index
    %c0_18 = arith.constant 0 : index
    %22 = vector.load %arg8[%c0_17, %c0_18] : memref<2x128xf32, #tpu.memory_space<vmem>>, vector<2x128xf32>
    tpu.vector_store %arg8[%c0_17, %c0_18], %21 {strides = array<i32>} : memref<2x128xf32, #tpu.memory_space<vmem>>, vector<2x128xf32>,
    return
  }
  func.func @transform_0(%arg0: i32) -> (i32, i32) {
    %c0_i32 = arith.constant 0 : i32
    %c0_i32_0 = arith.constant 0 : i32
    return %arg0, %c0_i32 : i32, i32
  }
  func.func @transform_1(%arg0: i32) -> (i32, i32) {
    %c0_i32 = arith.constant 0 : i32
    %c0_i32_0 = arith.constant 0 : i32
    %c0_i32_1 = arith.constant 0 : i32
    return %c0_i32, %c0_i32_0 : i32, i32
  }
  func.func @transform_2(%arg0: i32) -> (i32, i32) {
    %c0_i32 = arith.constant 0 : i32
    %c0_i32_0 = arith.constant 0 : i32
    %c0_i32_1 = arith.constant 0 : i32
    return %c0_i32, %c0_i32_0 : i32, i32
  }
  func.func @transform_3(%arg0: i32) -> (i32, i32) {
    %c0_i32 = arith.constant 0 : i32
    %c0_i32_0 = arith.constant 0 : i32
    %c0_i32_1 = arith.constant 0 : i32
    return %c0_i32, %c0_i32_0 : i32, i32
  }
  func.func @transform_4(%arg0: i32) -> (i32, i32) {
    %c0_i32 = arith.constant 0 : i32
    %c0_i32_0 = arith.constant 0 : i32
    %c0_i32_1 = arith.constant 0 : i32
    return %c0_i32, %c0_i32_0 : i32, i32
  }
  func.func @transform_5(%arg0: i32) -> (i32, i32) {
    %c0_i32 = arith.constant 0 : i32
    %c0_i32_0 = arith.constant 0 : i32
    %c0_i32_1 = arith.constant 0 : i32
    return %c0_i32, %c0_i32_0 : i32, i32
  }
  func.func @transform_6(%arg0: i32) -> (i32, i32) {
    %c0_i32 = arith.constant 0 : i32
    %c0_i32_0 = arith.constant 0 : i32
    %c0_i32_1 = arith.constant 0 : i32
    return %c0_i32, %c0_i32_0 : i32, i32
  }
  func.func @transform_7(%arg0: i32) -> (i32, i32) {
    %c0_i32 = arith.constant 0 : i32
    %c0_i32_0 = arith.constant 0 : i32
    return %arg0, %c0_i32 : i32, i32
  }
}

</mosaic_0001>

<llo_original>
// kernel: tpu_custom_call.1
$region0: #{tpu_custom_call.1}
  #allocation0 [shape = 'u32[]', space=smem, size = 0x4, offset = 0x4, fixed_abs, tag = 'smem constant byte address 0x4 - core index']
  #allocation1 [shape = 'u32[144,128]{1,0:T(1,128)}', space=vmem, size = 0x12000, scoped, tag = 'internal scratch']
  %s0 = inlined_call_operand.hbm [shape: bf16[2,1024], index: 0, kind: input, shape index: {}]
  %s1 = inlined_call_operand.hbm [shape: bf16[1024,128], index: 1, kind: input, shape index: {}]
  %s2 = inlined_call_operand.vmem [shape: f32[1,128], index: 2, kind: input, shape index: {}]
  %s3 = inlined_call_operand.hbm [shape: bf16[128,128], index: 3, kind: input, shape index: {}]
  %s4 = inlined_call_operand.vmem [shape: f32[1,128], index: 4, kind: input, shape index: {}]
  %s5 = inlined_call_operand.hbm [shape: bf16[128,128], index: 5, kind: input, shape index: {}]
  %s6 = inlined_call_operand.vmem [shape: f32[1,128], index: 6, kind: input, shape index: {}]
  %s7 = inlined_call_operand.hbm [shape: f32[2,128], index: 7, kind: output, shape index: {}]
  %s8 = sld [smem:[#allocation0]]
  $region54: #{tpu_custom_call.1} parent=0
    _
  %s10 = ssub.s32 1, %s8
  %s11 = scalar_select 0, %s10, %s8
  $region1: #{tpu_custom_call.1} parent=0
    #allocation2 [shape = 'u8[4096]{0}', space=vmem, size = 0x1000, scoped, tag = 'input window, operand 0, single buffered']
    #allocation3 [shape = 's32[1]{0}', space=sflag, size = 0x4, scoped, tag = 'scoped memory for tpu_custom_call.1']
    #allocation4 [shape = 's32[1]{0}', space=sflag, size = 0x4, scoped, tag = 'scoped memory for tpu_custom_call.1']
    #allocation5 [shape = 'u8[262144]{0}', space=vmem, size = 0x40000, scoped, tag = 'input window, operand 1, single buffered']
    #allocation6 [shape = 's32[1]{0}', space=sflag, size = 0x4, scoped, tag = 'scoped memory for tpu_custom_call.1']
    #allocation7 [shape = 'u8[32768]{0}', space=vmem, size = 0x8000, scoped, tag = 'input window, operand 3, single buffered']
    #allocation8 [shape = 'u8[32768]{0}', space=vmem, size = 0x8000, scoped, tag = 'input window, operand 5, single buffered']
    #allocation9 [shape = 's32[1]{0}', space=sflag, size = 0x4, scoped, tag = 'scoped memory for tpu_custom_call.1']
    #allocation10 [shape = 'u8[1024]{0}', space=vmem, size = 0x400, scoped, tag = 'output window, operand 0, single buffered']
    %12 = vsyncpa [#allocation3], 0
    %13 = vsyncpa [#allocation6], 0
    %14 = vsyncpa [#allocation9], 0
    %15 = vsyncpa [#allocation4], 0
    // Predicated region
    $region2: #{tpu_custom_call.1} parent=1 // pred_check
      _
    $region3: #{tpu_custom_call.1} parent=1 // pred_check_branch
      %17 = sbr.rel (0) target = $region5
    $region4: #{tpu_custom_call.1} parent=1 // pred_region
      %s19 = ssub.s32 128, 128
      %20 = vsyncadd [#allocation3], %s19
      %s22 = sshll.u32 [#allocation2], 4
      %s23 = int_to_ptr.vmem [resolvable:$true] %s22
      %25 = dma.hbm_to_vmem [thread:$0]  %s0, 128, %s23, [#allocation3]
    $region5: #{tpu_custom_call.1} parent=1 // pred_fallthru
      _
    // Predicated region
    $region6: #{tpu_custom_call.1} parent=1 // pred_check
      _
    $region7: #{tpu_custom_call.1} parent=1 // pred_check_branch
      %27 = sbr.rel (0) target = $region9
    $region8: #{tpu_custom_call.1} parent=1 // pred_region
      %s29 = ssub.s32 8192, 8192
      %30 = vsyncadd [#allocation6], %s29
      %s31 = sshll.u32 [#allocation5], 4
      %s32 = int_to_ptr.vmem [resolvable:$true] %s31
      %37 = dma.hbm_to_vmem [thread:$0]  %s1, 8192, %s32, [#allocation6], 64, 64, 4
    $region9: #{tpu_custom_call.1} parent=1 // pred_fallthru
      _
    // Predicated region
    $region10: #{tpu_custom_call.1} parent=1 // pred_check
      _
    $region11: #{tpu_custom_call.1} parent=1 // pred_check_branch
      %39 = sbr.rel (0) target = $region13
    $region12: #{tpu_custom_call.1} parent=1 // pred_region
      _
    $region13: #{tpu_custom_call.1} parent=1 // pred_fallthru
      _
    // Predicated region
    $region14: #{tpu_custom_call.1} parent=1 // pred_check
      _
    $region15: #{tpu_custom_call.1} parent=1 // pred_check_branch
      %41 = sbr.rel (0) target = $region17
    $region16: #{tpu_custom_call.1} parent=1 // pred_region
      %s43 = ssub.s32 1024, 1024
      %44 = vsyncadd [#allocation6], %s43
      %s45 = sshll.u32 [#allocation7], 4
      %s46 = int_to_ptr.vmem [resolvable:$true] %s45
      %51 = dma.hbm_to_vmem [thread:$0]  %s3, 1024, %s46, [#allocation6], 64, 64, 4
    $region17: #{tpu_custom_call.1} parent=1 // pred_fallthru
      _
    // Predicated region
    $region18: #{tpu_custom_call.1} parent=1 // pred_check
      _
    $region19: #{tpu_custom_call.1} parent=1 // pred_check_branch
      %53 = sbr.rel (0) target = $region21
    $region20: #{tpu_custom_call.1} parent=1 // pred_region
      _
    $region21: #{tpu_custom_call.1} parent=1 // pred_fallthru
      _
    // Predicated region
    $region22: #{tpu_custom_call.1} parent=1 // pred_check
      _
    $region23: #{tpu_custom_call.1} parent=1 // pred_check_branch
      %55 = sbr.rel (0) target = $region25
    $region24: #{tpu_custom_call.1} parent=1 // pred_region
      %s57 = ssub.s32 1024, 1024
      %58 = vsyncadd [#allocation9], %s57
      %s59 = sshll.u32 [#allocation8], 4
      %s60 = int_to_ptr.vmem [resolvable:$true] %s59
      %65 = dma.hbm_to_vmem [thread:$0]  %s5, 1024, %s60, [#allocation9], 64, 64, 4
    $region25: #{tpu_custom_call.1} parent=1 // pred_fallthru
      _
    // Predicated region
    $region26: #{tpu_custom_call.1} parent=1 // pred_check
      _
    $region27: #{tpu_custom_call.1} parent=1 // pred_check_branch
      %67 = sbr.rel (0) target = $region29
    $region28: #{tpu_custom_call.1} parent=1 // pred_region
      _
    $region29: #{tpu_custom_call.1} parent=1 // pred_fallthru
      _
    // Predicated region
    $region30: #{tpu_custom_call.1} parent=1 // pred_check
      _
    $region31: #{tpu_custom_call.1} parent=1 // pred_check_branch
      %69 = sbr.rel (0) target = $region33
    $region32: #{tpu_custom_call.1} parent=1 // pred_region
      %70 = dma.done [#allocation3], 128
    $region33: #{tpu_custom_call.1} parent=1 // pred_fallthru
      _
    // Predicated region
    $region34: #{tpu_custom_call.1} parent=1 // pred_check
      _
    $region35: #{tpu_custom_call.1} parent=1 // pred_check_branch
      %72 = sbr.rel (0) target = $region37
    $region36: #{tpu_custom_call.1} parent=1 // pred_region
      %73 = dma.done [#allocation6], 8192
    $region37: #{tpu_custom_call.1} parent=1 // pred_fallthru
      _
    // Predicated region
    $region38: #{tpu_custom_call.1} parent=1 // pred_check
      _
    $region39: #{tpu_custom_call.1} parent=1 // pred_check_branch
      %75 = sbr.rel (0) target = $region41
    $region40: #{tpu_custom_call.1} parent=1 // pred_region
      %76 = dma.done [#allocation6], 1024
    $region41: #{tpu_custom_call.1} parent=1 // pred_fallthru
      _
    // Predicated region
    $region42: #{tpu_custom_call.1} parent=1 // pred_check
      _
    $region43: #{tpu_custom_call.1} parent=1 // pred_check_branch
      %78 = sbr.rel (0) target = $region45
    $region44: #{tpu_custom_call.1} parent=1 // pred_region
      %79 = dma.done [#allocation9], 1024
    $region45: #{tpu_custom_call.1} parent=1 // pred_fallthru
      _
    %v81 = vld [vmem:[%s2] sm:$0x1]
    %v82 = vld [vmem:[%s4] sm:$0x1]
    %v83 = vld [vmem:[%s6] sm:$0x1]
    %v84 = vld [vmem:[#allocation2] sm:$0xff]
    %v85 = vld [vmem:[#allocation5] sm:$0xf]
    %v86 = vld [vmem:[#allocation5 + $0x4] sm:$0xf]
    %v87 = vld [vmem:[#allocation5 + $0x8] sm:$0xf]
    %v88 = vld [vmem:[#allocation5 + $0xc] sm:$0xf]
    %v89 = vld [vmem:[#allocation5 + $0x10] sm:$0xf]
    %v90 = vld [vmem:[#allocation5 + $0x14] sm:$0xf]
    %v91 = vld [vmem:[#allocation5 + $0x18] sm:$0xf]
    %v92 = vld [vmem:[#allocation5 + $0x1c] sm:$0xf]
    %v93 = vld [vmem:[#allocation5 + $0x20] sm:$0xf]
    %v94 = vld [vmem:[#allocation5 + $0x24] sm:$0xf]
    %v95 = vld [vmem:[#allocation5 + $0x28] sm:$0xf]
    %v96 = vld [vmem:[#allocation5 + $0x2c] sm:$0xf]
    %v97 = vld [vmem:[#allocation5 + $0x30] sm:$0xf]
    %v98 = vld [vmem:[#allocation5 + $0x34] sm:$0xf]
    %v99 = vld [vmem:[#allocation5 + $0x38] sm:$0xf]
    %v100 = vld [vmem:[#allocation5 + $0x3c] sm:$0xf]
    %v101 = vld [vmem:[#allocation5 + $0x40] sm:$0xf]
    %v102 = vld [vmem:[#allocation5 + $0x44] sm:$0xf]
    %v103 = vld [vmem:[#allocation5 + $0x48] sm:$0xf]
    %v104 = vld [vmem:[#allocation5 + $0x4c] sm:$0xf]
    %v105 = vld [vmem:[#allocation5 + $0x50] sm:$0xf]
    %v106 = vld [vmem:[#allocation5 + $0x54] sm:$0xf]
    %v107 = vld [vmem:[#allocation5 + $0x58] sm:$0xf]
    %v108 = vld [vmem:[#allocation5 + $0x5c] sm:$0xf]
    %v109 = vld [vmem:[#allocation5 + $0x60] sm:$0xf]
    %v110 = vld [vmem:[#allocation5 + $0x64] sm:$0xf]
    %v111 = vld [vmem:[#allocation5 + $0x68] sm:$0xf]
    %v112 = vld [vmem:[#allocation5 + $0x6c] sm:$0xf]
    %v113 = vld [vmem:[#allocation5 + $0x70] sm:$0xf]
    %v114 = vld [vmem:[#allocation5 + $0x74] sm:$0xf]
    %v115 = vld [vmem:[#allocation5 + $0x78] sm:$0xf]
    %v116 = vld [vmem:[#allocation5 + $0x7c] sm:$0xf]
    %v117 = vld [vmem:[#allocation5 + $0x80] sm:$0xf]
    %v118 = vld [vmem:[#allocation5 + $0x84] sm:$0xf]
    %v119 = vld [vmem:[#allocation5 + $0x88] sm:$0xf]
    %v120 = vld [vmem:[#allocation5 + $0x8c] sm:$0xf]
    %v121 = vld [vmem:[#allocation5 + $0x90] sm:$0xf]
    %v122 = vld [vmem:[#allocation5 + $0x94] sm:$0xf]
    %v123 = vld [vmem:[#allocation5 + $0x98] sm:$0xf]
    %v124 = vld [vmem:[#allocation5 + $0x9c] sm:$0xf]
    %v125 = vld [vmem:[#allocation5 + $0xa0] sm:$0xf]
    %v126 = vld [vmem:[#allocation5 + $0xa4] sm:$0xf]
    %v127 = vld [vmem:[#allocation5 + $0xa8] sm:$0xf]
    %v128 = vld [vmem:[#allocation5 + $0xac] sm:$0xf]
    %v129 = vld [vmem:[#allocation5 + $0xb0] sm:$0xf]
    %v130 = vld [vmem:[#allocation5 + $0xb4] sm:$0xf]
    %v131 = vld [vmem:[#allocation5 + $0xb8] sm:$0xf]
    %v132 = vld [vmem:[#allocation5 + $0xbc] sm:$0xf]
    %v133 = vld [vmem:[#allocation5 + $0xc0] sm:$0xf]
    %v134 = vld [vmem:[#allocation5 + $0xc4] sm:$0xf]
    %v135 = vld [vmem:[#allocation5 + $0xc8] sm:$0xf]
    %v136 = vld [vmem:[#allocation5 + $0xcc] sm:$0xf]
    %v137 = vld [vmem:[#allocation5 + $0xd0] sm:$0xf]
    %v138 = vld [vmem:[#allocation5 + $0xd4] sm:$0xf]
    %v139 = vld [vmem:[#allocation5 + $0xd8] sm:$0xf]
    %v140 = vld [vmem:[#allocation5 + $0xdc] sm:$0xf]
    %v141 = vld [vmem:[#allocation5 + $0xe0] sm:$0xf]
    %v142 = vld [vmem:[#allocation5 + $0xe4] sm:$0xf]
    %v143 = vld [vmem:[#allocation5 + $0xe8] sm:$0xf]
    %v144 = vld [vmem:[#allocation5 + $0xec] sm:$0xf]
    %v145 = vld [vmem:[#allocation5 + $0xf0] sm:$0xf]
    %v146 = vld [vmem:[#allocation5 + $0xf4] sm:$0xf]
    %v147 = vld [vmem:[#allocation5 + $0xf8] sm:$0xf]
    %v148 = vld [vmem:[#allocation5 + $0xfc] sm:$0xf]
    %v149 = vld [vmem:[#allocation5 + $0x100] sm:$0xf]
    %v150 = vld [vmem:[#allocation5 + $0x104] sm:$0xf]
    %v151 = vld [vmem:[#allocation5 + $0x108] sm:$0xf]
    %v152 = vld [vmem:[#allocation5 + $0x10c] sm:$0xf]
    %v153 = vld [vmem:[#allocation5 + $0x110] sm:$0xf]
    %v154 = vld [vmem:[#allocation5 + $0x114] sm:$0xf]
    %v155 = vld [vmem:[#allocation5 + $0x118] sm:$0xf]
    %v156 = vld [vmem:[#allocation5 + $0x11c] sm:$0xf]
    %v157 = vld [vmem:[#allocation5 + $0x120] sm:$0xf]
    %v158 = vld [vmem:[#allocation5 + $0x124] sm:$0xf]
    %v159 = vld [vmem:[#allocation5 + $0x128] sm:$0xf]
    %v160 = vld [vmem:[#allocation5 + $0x12c] sm:$0xf]
    %v161 = vld [vmem:[#allocation5 + $0x130] sm:$0xf]
    %v162 = vld [vmem:[#allocation5 + $0x134] sm:$0xf]
    %v163 = vld [vmem:[#allocation5 + $0x138] sm:$0xf]
    %v164 = vld [vmem:[#allocation5 + $0x13c] sm:$0xf]
    %v165 = vld [vmem:[#allocation5 + $0x140] sm:$0xf]
    %v166 = vld [vmem:[#allocation5 + $0x144] sm:$0xf]
    %v167 = vld [vmem:[#allocation5 + $0x148] sm:$0xf]
    %v168 = vld [vmem:[#allocation5 + $0x14c] sm:$0xf]
    %v169 = vld [vmem:[#allocation5 + $0x150] sm:$0xf]
    %v170 = vld [vmem:[#allocation5 + $0x154] sm:$0xf]
    %v171 = vld [vmem:[#allocation5 + $0x158] sm:$0xf]
    %v172 = vld [vmem:[#allocation5 + $0x15c] sm:$0xf]
    %v173 = vld [vmem:[#allocation5 + $0x160] sm:$0xf]
    %v174 = vld [vmem:[#allocation5 + $0x164] sm:$0xf]
    %v175 = vld [vmem:[#allocation5 + $0x168] sm:$0xf]
    %v176 = vld [vmem:[#allocation5 + $0x16c] sm:$0xf]
    %v177 = vld [vmem:[#allocation5 + $0x170] sm:$0xf]
    %v178 = vld [vmem:[#allocation5 + $0x174] sm:$0xf]
    %v179 = vld [vmem:[#allocation5 + $0x178] sm:$0xf]
    %v180 = vld [vmem:[#allocation5 + $0x17c] sm:$0xf]
    %v181 = vld [vmem:[#allocation5 + $0x180] sm:$0xf]
    %v182 = vld [vmem:[#allocation5 + $0x184] sm:$0xf]
    %v183 = vld [vmem:[#allocation5 + $0x188] sm:$0xf]
    %v184 = vld [vmem:[#allocation5 + $0x18c] sm:$0xf]
    %v185 = vld [vmem:[#allocation5 + $0x190] sm:$0xf]
    %v186 = vld [vmem:[#allocation5 + $0x194] sm:$0xf]
    %v187 = vld [vmem:[#allocation5 + $0x198] sm:$0xf]
    %v188 = vld [vmem:[#allocation5 + $0x19c] sm:$0xf]
    %v189 = vld [vmem:[#allocation5 + $0x1a0] sm:$0xf]
    %v190 = vld [vmem:[#allocation5 + $0x1a4] sm:$0xf]
    %v191 = vld [vmem:[#allocation5 + $0x1a8] sm:$0xf]
    %v192 = vld [vmem:[#allocation5 + $0x1ac] sm:$0xf]
    %v193 = vld [vmem:[#allocation5 + $0x1b0] sm:$0xf]
    %v194 = vld [vmem:[#allocation5 + $0x1b4] sm:$0xf]
    %v195 = vld [vmem:[#allocation5 + $0x1b8] sm:$0xf]
    %v196 = vld [vmem:[#allocation5 + $0x1bc] sm:$0xf]
    %v197 = vld [vmem:[#allocation5 + $0x1c0] sm:$0xf]
    %v198 = vld [vmem:[#allocation5 + $0x1c4] sm:$0xf]
    %v199 = vld [vmem:[#allocation5 + $0x1c8] sm:$0xf]
    %v200 = vld [vmem:[#allocation5 + $0x1cc] sm:$0xf]
    %v201 = vld [vmem:[#allocation5 + $0x1d0] sm:$0xf]
    %v202 = vld [vmem:[#allocation5 + $0x1d4] sm:$0xf]
    %v203 = vld [vmem:[#allocation5 + $0x1d8] sm:$0xf]
    %v204 = vld [vmem:[#allocation5 + $0x1dc] sm:$0xf]
    %v205 = vld [vmem:[#allocation5 + $0x1e0] sm:$0xf]
    %v206 = vld [vmem:[#allocation5 + $0x1e4] sm:$0xf]
    %v207 = vld [vmem:[#allocation5 + $0x1e8] sm:$0xf]
    %v208 = vld [vmem:[#allocation5 + $0x1ec] sm:$0xf]
    %v209 = vld [vmem:[#allocation5 + $0x1f0] sm:$0xf]
    %v210 = vld [vmem:[#allocation5 + $0x1f4] sm:$0xf]
    %v211 = vld [vmem:[#allocation5 + $0x1f8] sm:$0xf]
    %v212 = vld [vmem:[#allocation5 + $0x1fc] sm:$0xf]
    %v214 = vlaneseq
    %v215 = vshrl.u32 %v214, 7
    %v216 = vsub.s32 0, %v215
    %v217 = vrot.slane %v81, %v216
    %v220 = vcombine.high %v84, %v84
    %v222 = vunpack.c.l.s4 1966171168
    %v223 = vunpack.c.0.s8 %v222
    %v224 = vlaneseq
    %v225 = vshrl.u32 %v224, 7
    %v226 = vsub.s32 %v223, %v225
    %v227 = vrot.slane %v84, %v226
    %v229 = vunpack.c.l.s4 1966171168
    %v230 = vunpack.c.0.s8 %v229
    %v231 = vlaneseq
    %v232 = vshrl.u32 %v231, 7
    %v233 = vsub.s32 %v230, %v232
    %v234 = vrot.slane %v220, %v233
    %v235 = vcombine.high %v227, %v227
    %v236 = vcombine.high %v234, %v234
    %v238 = vunpack.c.l.s4 1966171168
    %v239 = vunpack.c.0.s8 %v238
    %v240 = vlaneseq
    %v241 = vshrl.u32 %v240, 7
    %v242 = vsub.s32 %v239, %v241
    %v243 = vrot.slane %v227, %v242
    %v245 = vunpack.c.l.s4 1966171168
    %v246 = vunpack.c.0.s8 %v245
    %v247 = vlaneseq
    %v248 = vshrl.u32 %v247, 7
    %v249 = vsub.s32 %v246, %v248
    %v250 = vrot.slane %v234, %v249
    %v252 = vunpack.c.l.s4 1966171168
    %v253 = vunpack.c.0.s8 %v252
    %v254 = vlaneseq
    %v255 = vshrl.u32 %v254, 7
    %v256 = vsub.s32 %v253, %v255
    %v257 = vrot.slane %v235, %v256
    %v259 = vunpack.c.l.s4 1966171168
    %v260 = vunpack.c.0.s8 %v259
    %v261 = vlaneseq
    %v262 = vshrl.u32 %v261, 7
    %v263 = vsub.s32 %v260, %v262
    %v264 = vrot.slane %v236, %v263
    %v265 = vcombine.high %v243, %v243
    %v266 = vcombine.high %v250, %v250
    %v267 = vcombine.high %v257, %v257
    %v268 = vcombine.high %v264, %v264
    %v405 = vunpack.c.l.b16 %v85
    %v406 = vunpack.c.l.b16 %v86
    %v407 = vunpack.c.l.b16 %v87
    %v408 = vunpack.c.l.b16 %v88
    %v409 = vunpack.c.l.b16 %v89
    %v410 = vunpack.c.l.b16 %v90
    %v411 = vunpack.c.l.b16 %v91
    %v412 = vunpack.c.l.b16 %v92
    %v413 = vunpack.c.l.b16 %v93
    %v414 = vunpack.c.l.b16 %v94
    %v415 = vunpack.c.l.b16 %v95
    %v416 = vunpack.c.l.b16 %v96
    %v417 = vunpack.c.l.b16 %v97
    %v418 = vunpack.c.l.b16 %v98
    %v419 = vunpack.c.l.b16 %v99
    %v420 = vunpack.c.l.b16 %v100
    %v421 = vunpack.c.l.b16 %v101
    %v422 = vunpack.c.l.b16 %v102
    %v423 = vunpack.c.l.b16 %v103
    %v424 = vunpack.c.l.b16 %v104
    %v425 = vunpack.c.l.b16 %v105
    %v426 = vunpack.c.l.b16 %v106
    %v427 = vunpack.c.l.b16 %v107
    %v428 = vunpack.c.l.b16 %v108
    %v429 = vunpack.c.l.b16 %v109
    %v430 = vunpack.c.l.b16 %v110
    %v431 = vunpack.c.l.b16 %v111
    %v432 = vunpack.c.l.b16 %v112
    %v433 = vunpack.c.l.b16 %v113
    %v434 = vunpack.c.l.b16 %v114
    %v435 = vunpack.c.l.b16 %v115
    %v436 = vunpack.c.l.b16 %v116
    %v437 = vunpack.c.l.b16 %v117
    %v438 = vunpack.c.l.b16 %v118
    %v439 = vunpack.c.l.b16 %v119
    %v440 = vunpack.c.l.b16 %v120
    %v441 = vunpack.c.l.b16 %v121
    %v442 = vunpack.c.l.b16 %v122
    %v443 = vunpack.c.l.b16 %v123
    %v444 = vunpack.c.l.b16 %v124
    %v445 = vunpack.c.l.b16 %v125
    %v446 = vunpack.c.l.b16 %v126
    %v447 = vunpack.c.l.b16 %v127
    %v448 = vunpack.c.l.b16 %v128
    %v449 = vunpack.c.l.b16 %v129
    %v450 = vunpack.c.l.b16 %v130
    %v451 = vunpack.c.l.b16 %v131
    %v452 = vunpack.c.l.b16 %v132
    %v453 = vunpack.c.l.b16 %v133
    %v454 = vunpack.c.l.b16 %v134
    %v455 = vunpack.c.l.b16 %v135
    %v456 = vunpack.c.l.b16 %v136
    %v457 = vunpack.c.l.b16 %v137
    %v458 = vunpack.c.l.b16 %v138
    %v459 = vunpack.c.l.b16 %v139
    %v460 = vunpack.c.l.b16 %v140
    %v461 = vunpack.c.l.b16 %v141
    %v462 = vunpack.c.l.b16 %v142
    %v463 = vunpack.c.l.b16 %v143
    %v464 = vunpack.c.l.b16 %v144
    %v465 = vunpack.c.l.b16 %v145
    %v466 = vunpack.c.l.b16 %v146
    %v467 = vunpack.c.l.b16 %v147
    %v468 = vunpack.c.l.b16 %v148
    %v469 = vunpack.c.l.b16 %v149
    %v470 = vunpack.c.l.b16 %v150
    %v471 = vunpack.c.l.b16 %v151
    %v472 = vunpack.c.l.b16 %v152
    %v473 = vunpack.c.l.b16 %v153
    %v474 = vunpack.c.l.b16 %v154
    %v475 = vunpack.c.l.b16 %v155
    %v476 = vunpack.c.l.b16 %v156
    %v477 = vunpack.c.l.b16 %v157
    %v478 = vunpack.c.l.b16 %v158
    %v479 = vunpack.c.l.b16 %v159
    %v480 = vunpack.c.l.b16 %v160
    %v481 = vunpack.c.l.b16 %v161
    %v482 = vunpack.c.l.b16 %v162
    %v483 = vunpack.c.l.b16 %v163
    %v484 = vunpack.c.l.b16 %v164
    %v485 = vunpack.c.l.b16 %v165
    %v486 = vunpack.c.l.b16 %v166
    %v487 = vunpack.c.l.b16 %v167
    %v488 = vunpack.c.l.b16 %v168
    %v489 = vunpack.c.l.b16 %v169
    %v490 = vunpack.c.l.b16 %v170
    %v491 = vunpack.c.l.b16 %v171
    %v492 = vunpack.c.l.b16 %v172
    %v493 = vunpack.c.l.b16 %v173
    %v494 = vunpack.c.l.b16 %v174
    %v495 = vunpack.c.l.b16 %v175
    %v496 = vunpack.c.l.b16 %v176
    %v497 = vunpack.c.l.b16 %v177
    %v498 = vunpack.c.l.b16 %v178
    %v499 = vunpack.c.l.b16 %v179
    %v500 = vunpack.c.l.b16 %v180
    %v501 = vunpack.c.l.b16 %v181
    %v502 = vunpack.c.l.b16 %v182
    %v503 = vunpack.c.l.b16 %v183
    %v504 = vunpack.c.l.b16 %v184
    %v505 = vunpack.c.l.b16 %v185
    %v506 = vunpack.c.l.b16 %v186
    %v507 = vunpack.c.l.b16 %v187
    %v508 = vunpack.c.l.b16 %v188
    %v509 = vunpack.c.l.b16 %v189
    %v510 = vunpack.c.l.b16 %v190
    %v511 = vunpack.c.l.b16 %v191
    %v512 = vunpack.c.l.b16 %v192
    %v513 = vunpack.c.l.b16 %v193
    %v514 = vunpack.c.l.b16 %v194
    %v515 = vunpack.c.l.b16 %v195
    %v516 = vunpack.c.l.b16 %v196
    %v517 = vunpack.c.l.b16 %v197
    %v518 = vunpack.c.l.b16 %v198
    %v519 = vunpack.c.l.b16 %v199
    %v520 = vunpack.c.l.b16 %v200
    %v521 = vunpack.c.l.b16 %v201
    %v522 = vunpack.c.l.b16 %v202
    %v523 = vunpack.c.l.b16 %v203
    %v524 = vunpack.c.l.b16 %v204
    %v525 = vunpack.c.l.b16 %v205
    %v526 = vunpack.c.l.b16 %v206
    %v527 = vunpack.c.l.b16 %v207
    %v528 = vunpack.c.l.b16 %v208
    %v529 = vunpack.c.l.b16 %v209
    %v530 = vunpack.c.l.b16 %v210
    %v531 = vunpack.c.l.b16 %v211
    %v532 = vunpack.c.l.b16 %v212
    %v533 = vpack.c.b16 %v406, %v405
    %v534 = vpack.c.b16 %v408, %v407
    %v535 = vpack.c.b16 %v410, %v409
    %v536 = vpack.c.b16 %v412, %v411
    %v537 = vpack.c.b16 %v414, %v413
    %v538 = vpack.c.b16 %v416, %v415
    %v539 = vpack.c.b16 %v418, %v417
    %v540 = vpack.c.b16 %v420, %v419
    %v541 = vpack.c.b16 %v422, %v421
    %v542 = vpack.c.b16 %v424, %v423
    %v543 = vpack.c.b16 %v426, %v425
    %v544 = vpack.c.b16 %v428, %v427
    %v545 = vpack.c.b16 %v430, %v429
    %v546 = vpack.c.b16 %v432, %v431
    %v547 = vpack.c.b16 %v434, %v433
    %v548 = vpack.c.b16 %v436, %v435
    %v549 = vpack.c.b16 %v438, %v437
    %v550 = vpack.c.b16 %v440, %v439
    %v551 = vpack.c.b16 %v442, %v441
    %v552 = vpack.c.b16 %v444, %v443
    %v553 = vpack.c.b16 %v446, %v445
    %v554 = vpack.c.b16 %v448, %v447
    %v555 = vpack.c.b16 %v450, %v449
    %v556 = vpack.c.b16 %v452, %v451
    %v557 = vpack.c.b16 %v454, %v453
    %v558 = vpack.c.b16 %v456, %v455
    %v559 = vpack.c.b16 %v458, %v457
    %v560 = vpack.c.b16 %v460, %v459
    %v561 = vpack.c.b16 %v462, %v461
    %v562 = vpack.c.b16 %v464, %v463
    %v563 = vpack.c.b16 %v466, %v465
    %v564 = vpack.c.b16 %v468, %v467
    %v565 = vpack.c.b16 %v470, %v469
    %v566 = vpack.c.b16 %v472, %v471
    %v567 = vpack.c.b16 %v474, %v473
    %v568 = vpack.c.b16 %v476, %v475
    %v569 = vpack.c.b16 %v478, %v477
    %v570 = vpack.c.b16 %v480, %v479
    %v571 = vpack.c.b16 %v482, %v481
    %v572 = vpack.c.b16 %v484, %v483
    %v573 = vpack.c.b16 %v486, %v485
    %v574 = vpack.c.b16 %v488, %v487
    %v575 = vpack.c.b16 %v490, %v489
    %v576 = vpack.c.b16 %v492, %v491
    %v577 = vpack.c.b16 %v494, %v493
    %v578 = vpack.c.b16 %v496, %v495
    %v579 = vpack.c.b16 %v498, %v497
    %v580 = vpack.c.b16 %v500, %v499
    %v581 = vpack.c.b16 %v502, %v501
    %v582 = vpack.c.b16 %v504, %v503
    %v583 = vpack.c.b16 %v506, %v505
    %v584 = vpack.c.b16 %v508, %v507
    %v585 = vpack.c.b16 %v510, %v509
    %v586 = vpack.c.b16 %v512, %v511
    %v587 = vpack.c.b16 %v514, %v513
    %v588 = vpack.c.b16 %v516, %v515
    %v589 = vpack.c.b16 %v518, %v517
    %v590 = vpack.c.b16 %v520, %v519
    %v591 = vpack.c.b16 %v522, %v521
    %v592 = vpack.c.b16 %v524, %v523
    %v593 = vpack.c.b16 %v526, %v525
    %v594 = vpack.c.b16 %v528, %v527
    %v595 = vpack.c.b16 %v530, %v529
    %v596 = vpack.c.b16 %v532, %v531
    %661 = vmatprep.subr.bf16.mxu0 0
    %662 = vmatpush1.bf16.msra.mxu0 %v533
    %663 = vmatprep.subr.bf16.mxu0 0
    %664 = vmatpush1.bf16.msra.mxu0 %v534
    %665 = vmatprep.subr.bf16.mxu0 0
    %666 = vmatpush1.bf16.msra.mxu0 %v535
    %667 = vmatprep.subr.bf16.mxu0 0
    %668 = vmatpush1.bf16.msra.mxu0 %v536
    %669 = vmatprep.subr.bf16.mxu0 0
    %670 = vmatpush1.bf16.msra.mxu0 %v537
    %671 = vmatprep.subr.bf16.mxu0 0
    %672 = vmatpush1.bf16.msra.mxu0 %v538
    %673 = vmatprep.subr.bf16.mxu0 0
    %674 = vmatpush1.bf16.msra.mxu0 %v539
    %675 = vmatprep.subr.bf16.mxu0 0
    %676 = vmatpush1.bf16.msra.mxu0 %v540
    %677 = vmatprep.subr.bf16.mxu0 0
    %678 = vmatpush1.bf16.msra.mxu0 %v541
    %679 = vmatprep.subr.bf16.mxu0 0
    %680 = vmatpush1.bf16.msra.mxu0 %v542
    %681 = vmatprep.subr.bf16.mxu0 0
    %682 = vmatpush1.bf16.msra.mxu0 %v543
    %683 = vmatprep.subr.bf16.mxu0 0
    %684 = vmatpush1.bf16.msra.mxu0 %v544
    %685 = vmatprep.subr.bf16.mxu0 0
    %686 = vmatpush1.bf16.msra.mxu0 %v545
    %687 = vmatprep.subr.bf16.mxu0 0
    %688 = vmatpush1.bf16.msra.mxu0 %v546
    %689 = vmatprep.subr.bf16.mxu0 0
    %690 = vmatpush1.bf16.msra.mxu0 %v547
    %691 = vmatprep.subr.bf16.mxu0 0
    %692 = vmatpush1.bf16.msra.mxu0 %v548
    %693 = vmatprep.mubr.bf16.mxu0 %v257
    %694 = vmatmul.mubr.bf16.gmra.mrb[0].mxu0 %v243
    %v695 = vpop.f32.mrb[0].mxu0
    %v696 = vadd.f32 %v217, %v695
    %v697 = vpop.f32.mrb[0].mxu0
    %v698 = vpop.f32.mrb[0].mxu0
    %v699 = vpop.f32.mrb[0].mxu0
    %700 = vdwg.mxu0
    %701 = vmatprep.subr.bf16.mxu0 0
    %702 = vmatpush1.bf16.msra.mxu0 %v549
    %703 = vmatprep.subr.bf16.mxu0 0
    %704 = vmatpush1.bf16.msra.mxu0 %v550
    %705 = vmatprep.subr.bf16.mxu0 0
    %706 = vmatpush1.bf16.msra.mxu0 %v551
    %707 = vmatprep.subr.bf16.mxu0 0
    %708 = vmatpush1.bf16.msra.mxu0 %v552
    %709 = vmatprep.subr.bf16.mxu0 0
    %710 = vmatpush1.bf16.msra.mxu0 %v553
    %711 = vmatprep.subr.bf16.mxu0 0
    %712 = vmatpush1.bf16.msra.mxu0 %v554
    %713 = vmatprep.subr.bf16.mxu0 0
    %714 = vmatpush1.bf16.msra.mxu0 %v555
    %715 = vmatprep.subr.bf16.mxu0 0
    %716 = vmatpush1.bf16.msra.mxu0 %v556
    %717 = vmatprep.subr.bf16.mxu0 0
    %718 = vmatpush1.bf16.msra.mxu0 %v557
    %719 = vmatprep.subr.bf16.mxu0 0
    %720 = vmatpush1.bf16.msra.mxu0 %v558
    %721 = vmatprep.subr.bf16.mxu0 0
    %722 = vmatpush1.bf16.msra.mxu0 %v559
    %723 = vmatprep.subr.bf16.mxu0 0
    %724 = vmatpush1.bf16.msra.mxu0 %v560
    %725 = vmatprep.subr.bf16.mxu0 0
    %726 = vmatpush1.bf16.msra.mxu0 %v561
    %727 = vmatprep.subr.bf16.mxu0 0
    %728 = vmatpush1.bf16.msra.mxu0 %v562
    %729 = vmatprep.subr.bf16.mxu0 0
    %730 = vmatpush1.bf16.msra.mxu0 %v563
    %731 = vmatprep.subr.bf16.mxu0 0
    %732 = vmatpush1.bf16.msra.mxu0 %v564
    %733 = vmatprep.mubr.bf16.mxu0 %v267
    %734 = vmatmul.mubr.bf16.gmra.mrb[0].mxu0 %v265
    %v735 = vpop.f32.mrb[0].mxu0
    %v736 = vadd.f32 %v696, %v735
    %v737 = vpop.f32.mrb[0].mxu0
    %v738 = vpop.f32.mrb[0].mxu0
    %v739 = vpop.f32.mrb[0].mxu0
    %740 = vdwg.mxu0
    %741 = vmatprep.subr.bf16.mxu0 0
    %742 = vmatpush1.bf16.msra.mxu0 %v565
    %743 = vmatprep.subr.bf16.mxu0 0
    %744 = vmatpush1.bf16.msra.mxu0 %v566
    %745 = vmatprep.subr.bf16.mxu0 0
    %746 = vmatpush1.bf16.msra.mxu0 %v567
    %747 = vmatprep.subr.bf16.mxu0 0
    %748 = vmatpush1.bf16.msra.mxu0 %v568
    %749 = vmatprep.subr.bf16.mxu0 0
    %750 = vmatpush1.bf16.msra.mxu0 %v569
    %751 = vmatprep.subr.bf16.mxu0 0
    %752 = vmatpush1.bf16.msra.mxu0 %v570
    %753 = vmatprep.subr.bf16.mxu0 0
    %754 = vmatpush1.bf16.msra.mxu0 %v571
    %755 = vmatprep.subr.bf16.mxu0 0
    %756 = vmatpush1.bf16.msra.mxu0 %v572
    %757 = vmatprep.subr.bf16.mxu0 0
    %758 = vmatpush1.bf16.msra.mxu0 %v573
    %759 = vmatprep.subr.bf16.mxu0 0
    %760 = vmatpush1.bf16.msra.mxu0 %v574
    %761 = vmatprep.subr.bf16.mxu0 0
    %762 = vmatpush1.bf16.msra.mxu0 %v575
    %763 = vmatprep.subr.bf16.mxu0 0
    %764 = vmatpush1.bf16.msra.mxu0 %v576
    %765 = vmatprep.subr.bf16.mxu0 0
    %766 = vmatpush1.bf16.msra.mxu0 %v577
    %767 = vmatprep.subr.bf16.mxu0 0
    %768 = vmatpush1.bf16.msra.mxu0 %v578
    %769 = vmatprep.subr.bf16.mxu0 0
    %770 = vmatpush1.bf16.msra.mxu0 %v579
    %771 = vmatprep.subr.bf16.mxu0 0
    %772 = vmatpush1.bf16.msra.mxu0 %v580
    %773 = vmatprep.mubr.bf16.mxu0 %v264
    %774 = vmatmul.mubr.bf16.gmra.mrb[0].mxu0 %v250
    %v775 = vpop.f32.mrb[0].mxu0
    %v776 = vadd.f32 %v736, %v775
    %v777 = vpop.f32.mrb[0].mxu0
    %v778 = vpop.f32.mrb[0].mxu0
    %v779 = vpop.f32.mrb[0].mxu0
    %780 = vdwg.mxu0
    %781 = vmatprep.subr.bf16.mxu0 0
    %782 = vmatpush1.bf16.msra.mxu0 %v581
    %783 = vmatprep.subr.bf16.mxu0 0
    %784 = vmatpush1.bf16.msra.mxu0 %v582
    %785 = vmatprep.subr.bf16.mxu0 0
    %786 = vmatpush1.bf16.msra.mxu0 %v583
    %787 = vmatprep.subr.bf16.mxu0 0
    %788 = vmatpush1.bf16.msra.mxu0 %v584
    %789 = vmatprep.subr.bf16.mxu0 0
    %790 = vmatpush1.bf16.msra.mxu0 %v585
    %791 = vmatprep.subr.bf16.mxu0 0
    %792 = vmatpush1.bf16.msra.mxu0 %v586
    %793 = vmatprep.subr.bf16.mxu0 0
    %794 = vmatpush1.bf16.msra.mxu0 %v587
    %795 = vmatprep.subr.bf16.mxu0 0
    %796 = vmatpush1.bf16.msra.mxu0 %v588
    %797 = vmatprep.subr.bf16.mxu0 0
    %798 = vmatpush1.bf16.msra.mxu0 %v589
    %799 = vmatprep.subr.bf16.mxu0 0
    %800 = vmatpush1.bf16.msra.mxu0 %v590
    %801 = vmatprep.subr.bf16.mxu0 0
    %802 = vmatpush1.bf16.msra.mxu0 %v591
    %803 = vmatprep.subr.bf16.mxu0 0
    %804 = vmatpush1.bf16.msra.mxu0 %v592
    %805 = vmatprep.subr.bf16.mxu0 0
    %806 = vmatpush1.bf16.msra.mxu0 %v593
    %807 = vmatprep.subr.bf16.mxu0 0
    %808 = vmatpush1.bf16.msra.mxu0 %v594
    %809 = vmatprep.subr.bf16.mxu0 0
    %810 = vmatpush1.bf16.msra.mxu0 %v595
    %811 = vmatprep.subr.bf16.mxu0 0
    %812 = vmatpush1.bf16.msra.mxu0 %v596
    %813 = vmatprep.mubr.bf16.mxu0 %v268
    %814 = vmatmul.mubr.bf16.gmra.mrb[0].mxu0 %v266
    %v815 = vpop.f32.mrb[0].mxu0
    %v816 = vadd.f32 %v776, %v815
    %v817 = vpop.f32.mrb[0].mxu0
    %v818 = vpop.f32.mrb[0].mxu0
    %v819 = vpop.f32.mrb[0].mxu0
    %820 = vdwg.mxu0
    %v821 = vmax.f32 %v816, 0.0
    %v822 = vpack.c.bf16 %v821, %v821
    %v823 = vld [vmem:[#allocation7] sm:$0xf]
    %v824 = vld [vmem:[#allocation7 + $0x4] sm:$0xf]
    %v825 = vld [vmem:[#allocation7 + $0x8] sm:$0xf]
    %v826 = vld [vmem:[#allocation7 + $0xc] sm:$0xf]
    %v827 = vld [vmem:[#allocation7 + $0x10] sm:$0xf]
    %v828 = vld [vmem:[#allocation7 + $0x14] sm:$0xf]
    %v829 = vld [vmem:[#allocation7 + $0x18] sm:$0xf]
    %v830 = vld [vmem:[#allocation7 + $0x1c] sm:$0xf]
    %v831 = vld [vmem:[#allocation7 + $0x20] sm:$0xf]
    %v832 = vld [vmem:[#allocation7 + $0x24] sm:$0xf]
    %v833 = vld [vmem:[#allocation7 + $0x28] sm:$0xf]
    %v834 = vld [vmem:[#allocation7 + $0x2c] sm:$0xf]
    %v835 = vld [vmem:[#allocation7 + $0x30] sm:$0xf]
    %v836 = vld [vmem:[#allocation7 + $0x34] sm:$0xf]
    %v837 = vld [vmem:[#allocation7 + $0x38] sm:$0xf]
    %v838 = vld [vmem:[#allocation7 + $0x3c] sm:$0xf]
    %v840 = vlaneseq
    %v841 = vshrl.u32 %v840, 7
    %v842 = vsub.s32 0, %v841
    %v843 = vrot.slane %v82, %v842
    %v861 = vunpack.c.l.b16 %v823
    %v862 = vunpack.c.l.b16 %v824
    %v863 = vunpack.c.l.b16 %v825
    %v864 = vunpack.c.l.b16 %v826
    %v865 = vunpack.c.l.b16 %v827
    %v866 = vunpack.c.l.b16 %v828
    %v867 = vunpack.c.l.b16 %v829
    %v868 = vunpack.c.l.b16 %v830
    %v869 = vunpack.c.l.b16 %v831
    %v870 = vunpack.c.l.b16 %v832
    %v871 = vunpack.c.l.b16 %v833
    %v872 = vunpack.c.l.b16 %v834
    %v873 = vunpack.c.l.b16 %v835
    %v874 = vunpack.c.l.b16 %v836
    %v875 = vunpack.c.l.b16 %v837
    %v876 = vunpack.c.l.b16 %v838
    %v877 = vpack.c.b16 %v862, %v861
    %v878 = vpack.c.b16 %v864, %v863
    %v879 = vpack.c.b16 %v866, %v865
    %v880 = vpack.c.b16 %v868, %v867
    %v881 = vpack.c.b16 %v870, %v869
    %v882 = vpack.c.b16 %v872, %v871
    %v883 = vpack.c.b16 %v874, %v873
    %v884 = vpack.c.b16 %v876, %v875
    %893 = vmatprep.subr.bf16.mxu0 0
    %894 = vmatpush1.bf16.msra.mxu0 %v877
    %895 = vmatprep.subr.bf16.mxu0 0
    %896 = vmatpush1.bf16.msra.mxu0 %v878
    %897 = vmatprep.subr.bf16.mxu0 0
    %898 = vmatpush1.bf16.msra.mxu0 %v879
    %899 = vmatprep.subr.bf16.mxu0 0
    %900 = vmatpush1.bf16.msra.mxu0 %v880
    %901 = vmatprep.subr.bf16.mxu0 0
    %902 = vmatpush1.bf16.msra.mxu0 %v881
    %903 = vmatprep.subr.bf16.mxu0 0
    %904 = vmatpush1.bf16.msra.mxu0 %v882
    %905 = vmatprep.subr.bf16.mxu0 0
    %906 = vmatpush1.bf16.msra.mxu0 %v883
    %907 = vmatprep.subr.bf16.mxu0 0
    %908 = vmatpush1.bf16.msra.mxu0 %v884
    %909 = vmatprep.subr.bf16.mxu0 0
    %910 = vmatpush1.bf16.msra.mxu0 0
    %911 = vmatprep.subr.bf16.mxu0 0
    %912 = vmatpush1.bf16.msra.mxu0 0
    %913 = vmatprep.subr.bf16.mxu0 0
    %914 = vmatpush1.bf16.msra.mxu0 0
    %915 = vmatprep.subr.bf16.mxu0 0
    %916 = vmatpush1.bf16.msra.mxu0 0
    %917 = vmatprep.subr.bf16.mxu0 0
    %918 = vmatpush1.bf16.msra.mxu0 0
    %919 = vmatprep.subr.bf16.mxu0 0
    %920 = vmatpush1.bf16.msra.mxu0 0
    %921 = vmatprep.subr.bf16.mxu0 0
    %922 = vmatpush1.bf16.msra.mxu0 0
    %923 = vmatprep.subr.bf16.mxu0 0
    %924 = vmatpush1.bf16.msra.mxu0 0
    %925 = vmatprep.mubr.bf16.mxu0 0
    %926 = vmatmul.mubr.bf16.gmra.mrb[0].mxu0 %v822
    %v927 = vpop.f32.mrb[0].mxu0
    %v928 = vadd.f32 %v843, %v927
    %v929 = vpop.f32.mrb[0].mxu0
    %v930 = vpop.f32.mrb[0].mxu0
    %v931 = vpop.f32.mrb[0].mxu0
    %932 = vdwg.mxu0
    %v933 = vmax.f32 %v928, 0.0
    %v934 = vpack.c.bf16 %v933, %v933
    %v935 = vld [vmem:[#allocation8] sm:$0xf]
    %v936 = vld [vmem:[#allocation8 + $0x4] sm:$0xf]
    %v937 = vld [vmem:[#allocation8 + $0x8] sm:$0xf]
    %v938 = vld [vmem:[#allocation8 + $0xc] sm:$0xf]
    %v939 = vld [vmem:[#allocation8 + $0x10] sm:$0xf]
    %v940 = vld [vmem:[#allocation8 + $0x14] sm:$0xf]
    %v941 = vld [vmem:[#allocation8 + $0x18] sm:$0xf]
    %v942 = vld [vmem:[#allocation8 + $0x1c] sm:$0xf]
    %v943 = vld [vmem:[#allocation8 + $0x20] sm:$0xf]
    %v944 = vld [vmem:[#allocation8 + $0x24] sm:$0xf]
    %v945 = vld [vmem:[#allocation8 + $0x28] sm:$0xf]
    %v946 = vld [vmem:[#allocation8 + $0x2c] sm:$0xf]
    %v947 = vld [vmem:[#allocation8 + $0x30] sm:$0xf]
    %v948 = vld [vmem:[#allocation8 + $0x34] sm:$0xf]
    %v949 = vld [vmem:[#allocation8 + $0x38] sm:$0xf]
    %v950 = vld [vmem:[#allocation8 + $0x3c] sm:$0xf]
    %v952 = vlaneseq
    %v953 = vshrl.u32 %v952, 7
    %v954 = vsub.s32 0, %v953
    %v955 = vrot.slane %v83, %v954
    %v973 = vunpack.c.l.b16 %v935
    %v974 = vunpack.c.l.b16 %v936
    %v975 = vunpack.c.l.b16 %v937
    %v976 = vunpack.c.l.b16 %v938
    %v977 = vunpack.c.l.b16 %v939
    %v978 = vunpack.c.l.b16 %v940
    %v979 = vunpack.c.l.b16 %v941
    %v980 = vunpack.c.l.b16 %v942
    %v981 = vunpack.c.l.b16 %v943
    %v982 = vunpack.c.l.b16 %v944
    %v983 = vunpack.c.l.b16 %v945
    %v984 = vunpack.c.l.b16 %v946
    %v985 = vunpack.c.l.b16 %v947
    %v986 = vunpack.c.l.b16 %v948
    %v987 = vunpack.c.l.b16 %v949
    %v988 = vunpack.c.l.b16 %v950
    %v989 = vpack.c.b16 %v974, %v973
    %v990 = vpack.c.b16 %v976, %v975
    %v991 = vpack.c.b16 %v978, %v977
    %v992 = vpack.c.b16 %v980, %v979
    %v993 = vpack.c.b16 %v982, %v981
    %v994 = vpack.c.b16 %v984, %v983
    %v995 = vpack.c.b16 %v986, %v985
    %v996 = vpack.c.b16 %v988, %v987
    %1005 = vmatprep.subr.bf16.mxu0 0
    %1006 = vmatpush1.bf16.msra.mxu0 %v989
    %1007 = vmatprep.subr.bf16.mxu0 0
    %1008 = vmatpush1.bf16.msra.mxu0 %v990
    %1009 = vmatprep.subr.bf16.mxu0 0
    %1010 = vmatpush1.bf16.msra.mxu0 %v991
    %1011 = vmatprep.subr.bf16.mxu0 0
    %1012 = vmatpush1.bf16.msra.mxu0 %v992
    %1013 = vmatprep.subr.bf16.mxu0 0
    %1014 = vmatpush1.bf16.msra.mxu0 %v993
    %1015 = vmatprep.subr.bf16.mxu0 0
    %1016 = vmatpush1.bf16.msra.mxu0 %v994
    %1017 = vmatprep.subr.bf16.mxu0 0
    %1018 = vmatpush1.bf16.msra.mxu0 %v995
    %1019 = vmatprep.subr.bf16.mxu0 0
    %1020 = vmatpush1.bf16.msra.mxu0 %v996
    %1021 = vmatprep.subr.bf16.mxu0 0
    %1022 = vmatpush1.bf16.msra.mxu0 0
    %1023 = vmatprep.subr.bf16.mxu0 0
    %1024 = vmatpush1.bf16.msra.mxu0 0
    %1025 = vmatprep.subr.bf16.mxu0 0
    %1026 = vmatpush1.bf16.msra.mxu0 0
    %1027 = vmatprep.subr.bf16.mxu0 0
    %1028 = vmatpush1.bf16.msra.mxu0 0
    %1029 = vmatprep.subr.bf16.mxu0 0
    %1030 = vmatpush1.bf16.msra.mxu0 0
    %1031 = vmatprep.subr.bf16.mxu0 0
    %1032 = vmatpush1.bf16.msra.mxu0 0
    %1033 = vmatprep.subr.bf16.mxu0 0
    %1034 = vmatpush1.bf16.msra.mxu0 0
    %1035 = vmatprep.subr.bf16.mxu0 0
    %1036 = vmatpush1.bf16.msra.mxu0 0
    %1037 = vmatprep.mubr.bf16.mxu0 0
    %1038 = vmatmul.mubr.bf16.gmra.mrb[0].mxu0 %v934
    %v1039 = vpop.f32.mrb[0].mxu0
    %v1040 = vadd.f32 %v955, %v1039
    %v1041 = vpop.f32.mrb[0].mxu0
    %v1042 = vpop.f32.mrb[0].mxu0
    %v1043 = vpop.f32.mrb[0].mxu0
    %1044 = vdwg.mxu0
    %1045 = vst [vmem:[#allocation10] sm:$0x3] %v1040
    // Predicated region
    $region46: #{tpu_custom_call.1} parent=1 // pred_check
      _
    $region47: #{tpu_custom_call.1} parent=1 // pred_check_branch
      %1047 = sbr.rel (0) target = $region49
    $region48: #{tpu_custom_call.1} parent=1 // pred_region
      %s1049 = ssub.s32 32, 32
      %1050 = vsyncadd [#allocation4], %s1049
      %s1052 = sshll.u32 [#allocation10], 4
      %s1053 = int_to_ptr.vmem [resolvable:$true] %s1052
      %1055 = dma.vmem_to_hbm [thread:$0]  %s1053, 32, %s7, [#allocation4]
    $region49: #{tpu_custom_call.1} parent=1 // pred_fallthru
      _
    // Predicated region
    $region50: #{tpu_custom_call.1} parent=1 // pred_check
      _
    $region51: #{tpu_custom_call.1} parent=1 // pred_check_branch
      %1057 = sbr.rel (0) target = $region53
    $region52: #{tpu_custom_call.1} parent=1 // pred_region
      %1058 = dma.done [#allocation4], 32
    $region53: #{tpu_custom_call.1} parent=1 // pred_fallthru
      _
    %1059 = vsyncpa [#allocation3], 1
    %1060 = vsyncpa [#allocation6], 1
    %1061 = vsyncpa [#allocation9], 1
    %1062 = vsyncpa [#allocation4], 1

</llo_original>
